<compile_context>
chip_gen: v5e
topology: v5e:2x2
jax: 0.10.0
libtpu: 0.0.40
codegen_flags: <defaults>
</compile_context>

<pallas_src>
import functools

import jax
import jax.numpy as jnp
from jax import lax
from jax.experimental import pallas as pl
from jax.experimental.pallas import tpu as pltpu

_CLAMP_MIN = 1e-12
_CLAMP_MAX = 1.0e12


def _center_loss_kernel(
    labels_ref,    # VMEM (b_tile, 1) int32 -- labels for this batch tile
    x_ref,         # VMEM (b_tile, D)       -- features for this batch tile
    centers_ref,   # VMEM (C, D)            -- resident class centers
    out_ref,       # VMEM (8, 128) f32      -- this core's partial-sum tile
    acc_ref,       # VMEM (1, 1) f32 scratch accumulator
    *,
    batch,             # true (unpadded) batch size
    b_tile,            # rows per grid step
    tiles_per_core,    # grid extent along the reduction axis
):
    p = pl.program_id(0)   # core-parallel axis
    t = pl.program_id(1)   # sequential reduction axis

    @pl.when(t == 0)
    def _init():
        acc_ref[...] = jnp.zeros_like(acc_ref)

    num_classes = centers_ref.shape[0]

    x = x_ref[...].astype(jnp.float32)                                  # (bt, D)
    labels = labels_ref[...]                                            # (bt, 1)
    classes = lax.broadcasted_iota(jnp.int32, (b_tile, num_classes), 1)
    onehot = (labels == classes).astype(jnp.float32)                    # (bt, C)

    # In-VMEM gather of c_{y_i}: one-hot matmul on the MXU (no HBM DMAs).
    c_sel = jnp.dot(onehot, centers_ref[...].astype(jnp.float32),
                    preferred_element_type=jnp.float32)                 # (bt, D)

    diff = x - c_sel
    d = jnp.sum(diff * diff, axis=1, keepdims=True)                     # (bt, 1)
    # Surviving entry of row i in PyTorch is clamp(distmat[i, y_i], 1e-12, 1e12).
    d = jnp.clip(d, _CLAMP_MIN, _CLAMP_MAX)

    # Mask rows past the true batch (ragged last tile / clamped overflow tile).
    tile_idx = p * tiles_per_core + t
    row_ids = tile_idx * b_tile + lax.broadcasted_iota(jnp.int32, (b_tile, 1), 0)
    d = jnp.where(row_ids < batch, d, 0.0)

    acc_ref[...] += jnp.sum(d, keepdims=True)

    @pl.when(t == pl.num_programs(1) - 1)
    def _finalize():
        # Write this core's partial sum into element [0, 0] of its output tile
        # (rest zeros) so the wrapper can simply jnp.sum() the output.
        r = lax.broadcasted_iota(jnp.int32, out_ref.shape, 0)
        c = lax.broadcasted_iota(jnp.int32, out_ref.shape, 1)
        out_ref[...] = jnp.where((r == 0) & (c == 0), acc_ref[0, 0], 0.0)


def _round_up(n, m):
    return ((n + m - 1) // m) * m


def center_loss(x, centers, labels, *, rows_per_tile=None):
    """x: (B, D), centers: (C, D), labels: (B,) int -> scalar f32 loss."""
    B, D = x.shape
    C, Dc = centers.shape
    assert D == Dc

    # Sublane alignment: 8 rows for 32-bit, 16 for bf16, 32 for 8-bit inputs.
    itemsize = max(1, x.dtype.itemsize)
    sub = 8 if itemsize >= 4 else 32 // itemsize

    if rows_per_tile is None:
        # VMEM-budget-driven batch tile: ~8 MiB for the double-buffered
        # (x, labels) tiles, capped at 1024 rows.
        budget = 8 * 1024 * 1024
        per_row = 2 * (D * itemsize + 4)
        cap = max(sub, min(1024, (budget // per_row) // sub * sub))
        rows_per_tile = min(_round_up(B, sub), cap)
    b_tile = _round_up(rows_per_tile, sub)

    num_tiles = -(-B // b_tile)
    n_par = 2 if num_tiles >= 2 else 1          # use both TensorCores on v7x
    tiles_per_core = -(-num_tiles // n_par)

    labels2d = labels.reshape(B, 1).astype(jnp.int32)

    def tile_index(p, t):
        # Clamp so the overflow tile (odd num_tiles) re-reads the last valid
        # tile; its rows are masked out inside the kernel.
        return jnp.minimum(p * tiles_per_core + t, num_tiles - 1)

    kernel = functools.partial(
        _center_loss_kernel, batch=B, b_tile=b_tile, tiles_per_core=tiles_per_core)

    grid_spec = pltpu.PrefetchScalarGridSpec(
        num_scalar_prefetch=0,
        grid=(n_par, tiles_per_core),
        in_specs=[
            pl.BlockSpec((b_tile, 1), lambda p, t: (tile_index(p, t), 0)),   # labels
            pl.BlockSpec((b_tile, D), lambda p, t: (tile_index(p, t), 0)),   # x tile
            pl.BlockSpec((C, D), lambda p, t: (0, 0)),                       # centers (resident)
        ],
        out_specs=pl.BlockSpec((8, 128), lambda p, t: (0, p)),               # per-core partial tile
        scratch_shapes=[pltpu.VMEM((1, 1), jnp.float32)],
    )

    # Explicit VMEM budgeting (v7x physical VMEM is 64 MiB; v5e default scoped
    # limit is only 16 MiB, so raise it for large tiles).
    est_vmem = 2 * (b_tile * (D * itemsize + 4) + C * D * centers.dtype.itemsize) + 16384
    vmem_limit = int(min(48 * 1024 * 1024, max(32 * 1024 * 1024, 4 * est_vmem)))

    x_bytes = B * D * itemsize
    c_bytes = C * D * centers.dtype.itemsize

    partials = pl.pallas_call(
        kernel,
        out_shape=jax.ShapeDtypeStruct((8, n_par * 128), jnp.float32),
        grid_spec=grid_spec,
        compiler_params=pltpu.CompilerParams(
            dimension_semantics=("parallel", "arbitrary"),
            vmem_limit_bytes=vmem_limit,
        ),
        cost_estimate=pl.CostEstimate(
            flops=2 * B * C * D + 4 * B * D,
            transcendentals=0,
            bytes_accessed=x_bytes + c_bytes + B * 4 + n_par * 8 * 128 * 4,
        ),
    )(labels2d, x, centers)

    # Each of the B*(C-1) masked-out distmat entries contributes clamp(0) = 1e-12.
    extra = jnp.float32(B * (C - 1)) * jnp.float32(_CLAMP_MIN)
    return (jnp.sum(partials) + extra) / jnp.float32(B)


def _reference_center_loss(x, centers, labels):
    """Pure-JAX reference mirroring the PyTorch forward."""
    B = x.shape[0]
    C = centers.shape[0]
    xf = x.astype(jnp.float32)
    cf = centers.astype(jnp.float32)
    xc = lax.dot_general(xf, cf, (((1,), (1,)), ((), ())),
                         precision=lax.Precision.HIGHEST,
                         preferred_element_type=jnp.float32)
    distmat = (jnp.sum(xf ** 2, axis=1, keepdims=True)
               + jnp.sum(cf ** 2, axis=1)[None, :]
               - 2.0 * xc)
    mask = (labels[:, None] == jnp.arange(C)[None, :]).astype(jnp.float32)
    dist = jnp.clip(distmat * mask, _CLAMP_MIN, _CLAMP_MAX)
    return jnp.sum(dist) / B


if __name__ == "__main__":
    num_classes = 16
    feat_dim = 32
    batch = 8

    key = jax.random.PRNGKey(0)
    k_x, k_c, k_l = jax.random.split(key, 3)

    # Deterministic "parameter" init (stand-in for torch.randn centers).
    centers = jax.random.normal(k_c, (num_classes, feat_dim), dtype=jnp.float32)
    x = jax.random.normal(k_x, (batch, feat_dim), dtype=jnp.float32)
    labels = jax.random.randint(k_l, (batch,), 0, num_classes, dtype=jnp.int32)

    loss = jax.block_until_ready(center_loss(x, centers, labels))
    ref = jax.block_until_ready(_reference_center_loss(x, centers, labels))
    # Kernel uses the direct ||x - c||^2 form; reference uses the PyTorch
    # expansion, so compare with a tolerance, not exact equality.
    assert jnp.allclose(loss, ref, rtol=1e-3, atol=1e-3), (loss, ref)

    # Ragged, multi-tile, dual-core path (odd tile count exercises the
    # clamped overflow tile and the row mask).
    batch2 = 300
    k_x2, k_l2 = jax.random.split(jax.random.PRNGKey(1), 2)
    x2 = jax.random.normal(k_x2, (batch2, feat_dim), dtype=jnp.float32)
    labels2 = jax.random.randint(k_l2, (batch2,), 0, num_classes, dtype=jnp.int32)
    loss2 = jax.block_until_ready(center_loss(x2, centers, labels2, rows_per_tile=64))
    ref2 = jax.block_until_ready(_reference_center_loss(x2, centers, labels2))
    assert jnp.allclose(loss2, ref2, rtol=1e-3, atol=1e-3), (loss2, ref2)

    print("KERNEL_OK")
</pallas_src>

<mosaic_0001>
module attributes {stable_mosaic.version = 11 : i64} {
  func.func @_center_loss_kernel(%arg0: i32, %arg1: i32, %arg2: memref<8x1xi32, #tpu.memory_space<vmem>>, %arg3: memref<8x32xf32, #tpu.memory_space<vmem>>, %arg4: memref<16x32xf32, #tpu.memory_space<vmem>>, %arg5: memref<8x128xf32, #tpu.memory_space<vmem>>, %arg6: memref<1x1xf32, #tpu.memory_space<vmem>>) attributes {dimension_semantics = [#tpu.dimension_semantics<parallel>, #tpu.dimension_semantics<arbitrary>], iteration_bounds = array<i64: 1, 1>, scalar_prefetch = 0 : i64, scratch_operands = 1 : i64, tpu.core_type = #tpu.core_type<tc>, window_params = [{transform_indices = @transform_0, window_bounds = array<i64: 8, 1>}, {transform_indices = @transform_1, window_bounds = array<i64: 8, 32>}, {pipeline_mode = #tpu.pipeline_mode<synchronous>, transform_indices = @transform_2, window_bounds = array<i64: 16, 32>}, {transform_indices = @transform_3, window_bounds = array<i64: 8, 128>}]} {
    %c0_i32 = arith.constant 0 : i32
    %0 = arith.cmpi eq, %arg1, %c0_i32 : i32
    %1 = arith.extui %0 : i1 to i32
    %c0_i32_0 = arith.constant 0 : i32
    %2 = arith.cmpi ne, %1, %c0_i32_0 : i32
    scf.if %2 {
      %cst_18 = arith.constant 0.000000e+00 : f32
      %41 = vector.broadcast %cst_18 : f32 to vector<1x1xf32>
      %c0_19 = arith.constant 0 : index
      %c0_20 = arith.constant 0 : index
      %42 = vector.load %arg6[%c0_19, %c0_20] : memref<1x1xf32, #tpu.memory_space<vmem>>, vector<1x1xf32>
      tpu.vector_store %arg6[%c0_19, %c0_20], %41 {strides = array<i32>} : memref<1x1xf32, #tpu.memory_space<vmem>>, vector<1x1xf32>,
    } else {
    }
    %c0 = arith.constant 0 : index
    %c0_1 = arith.constant 0 : index
    %3 = vector.load %arg3[%c0, %c0_1] : memref<8x32xf32, #tpu.memory_space<vmem>>, vector<8x32xf32>
    %c0_2 = arith.constant 0 : index
    %c0_3 = arith.constant 0 : index
    %4 = vector.load %arg2[%c0_2, %c0_3] : memref<8x1xi32, #tpu.memory_space<vmem>>, vector<8x1xi32>
    %5 = tpu.iota {dimensions = array<i32: 1>} : vector<8x16xi32>
    %6 = vector.broadcast %4 : vector<8x1xi32> to vector<8x16xi32>
    %7 = arith.cmpi eq, %6, %5 : vector<8x16xi32>
    %8 = arith.extui %7 : vector<8x16xi1> to vector<8x16xi32>
    %9 = arith.sitofp %8 : vector<8x16xi32> to vector<8x16xf32>
    %c0_4 = arith.constant 0 : index
    %c0_5 = arith.constant 0 : index
    %10 = vector.load %arg4[%c0_4, %c0_5] : memref<16x32xf32, #tpu.memory_space<vmem>>, vector<16x32xf32>
    %cst = arith.constant dense<0.000000e+00> : vector<8x32xf32>
    %11 = tpu.matmul %9, %10, %cst {dimension_numbers = #tpu.dot_dimension_numbers<[1], [0], [0], [1], [0, 0, 1, 1], [], []>} : vector<8x16xf32>, vector<16x32xf32>, vector<8x32xf32> -> vector<8x32xf32>
    %12 = arith.subf %3, %11 : vector<8x32xf32>
    %13 = arith.mulf %12, %12 : vector<8x32xf32>
    %cst_6 = arith.constant dense<0.000000e+00> : vector<8xf32>
    %14 = vector.multi_reduction <add>, %13, %cst_6 [1] : vector<8x32xf32> to vector<8xf32>
    %15 = vector.shape_cast %14 : vector<8xf32> to vector<8x1xf32>
    %cst_7 = arith.constant 9.99999996E-13 : f32
    %cst_8 = arith.constant 9.99999995E+11 : f32
    %16 = vector.broadcast %cst_7 : f32 to vector<8x1xf32>
    %17 = arith.maximumf %16, %15 : vector<8x1xf32>
    %18 = vector.broadcast %cst_8 : f32 to vector<8x1xf32>
    %19 = arith.minimumf %18, %17 : vector<8x1xf32>
    %c1_i32 = arith.constant 1 : i32
    %20 = arith.muli %arg0, %c1_i32 : i32
    %21 = arith.addi %20, %arg1 : i32
    %c8_i32 = arith.constant 8 : i32
    %22 = arith.muli %21, %c8_i32 : i32
    %23 = tpu.iota {dimensions = array<i32: 0>} : vector<8x1xi32>
    %24 = vector.broadcast %22 : i32 to vector<8x1xi32>
    %25 = arith.addi %24, %23 : vector<8x1xi32>
    %c8_i32_9 = arith.constant 8 : i32
    %26 = vector.broadcast %c8_i32_9 : i32 to vector<8x1xi32>
    %27 = arith.cmpi slt, %25, %26 : vector<8x1xi32>
    %cst_10 = arith.constant 0.000000e+00 : f32
    %28 = vector.broadcast %cst_10 : f32 to vector<8x1xf32>
    %29 = arith.select %27, %19, %28 : vector<8x1xi1>, vector<8x1xf32>
    %c0_11 = arith.constant 0 : index
    %c0_12 = arith.constant 0 : index
    %30 = vector.load %arg6[%c0_11, %c0_12] : memref<1x1xf32, #tpu.memory_space<vmem>>, vector<1x1xf32>
    %31 = vector.shape_cast %29 : vector<8x1xf32> to vector<1x8x1xf32>
    %cst_13 = arith.constant dense<0.000000e+00> : vector<1xf32>
    %32 = vector.multi_reduction <add>, %31, %cst_13 [1, 2] : vector<1x8x1xf32> to vector<1xf32>
    %33 = vector.shape_cast %32 : vector<1xf32> to vector<1x1x1xf32>
    %34 = vector.extract %33[0, 0, 0] : f32 from vector<1x1x1xf32>
    %35 = vector.broadcast %34 : f32 to vector<1x1xf32>
    %36 = arith.addf %30, %35 : vector<1x1xf32>
    %c0_14 = arith.constant 0 : index
    %c0_15 = arith.constant 0 : index
    %37 = vector.load %arg6[%c0_14, %c0_15] : memref<1x1xf32, #tpu.memory_space<vmem>>, vector<1x1xf32>
    tpu.vector_store %arg6[%c0_14, %c0_15], %36 {strides = array<i32>} : memref<1x1xf32, #tpu.memory_space<vmem>>, vector<1x1xf32>,
    %c0_i32_16 = arith.constant 0 : i32
    %38 = arith.cmpi eq, %arg1, %c0_i32_16 : i32
    %39 = arith.extui %38 : i1 to i32
    %c0_i32_17 = arith.constant 0 : i32
    %40 = arith.cmpi ne, %39, %c0_i32_17 : i32
    scf.if %40 {
      %41 = tpu.iota {dimensions = array<i32: 0>} : vector<8x128xi32>
      %42 = tpu.iota {dimensions = array<i32: 1>} : vector<8x128xi32>
      %c0_i32_18 = arith.constant 0 : i32
      %43 = vector.broadcast %c0_i32_18 : i32 to vector<8x128xi32>
      %44 = arith.cmpi eq, %41, %43 : vector<8x128xi32>
      %c0_i32_19 = arith.constant 0 : i32
      %45 = vector.broadcast %c0_i32_19 : i32 to vector<8x128xi32>
      %46 = arith.cmpi eq, %42, %45 : vector<8x128xi32>
      %47 = arith.andi %44, %46 : vector<8x128xi1>
      %c0_20 = arith.constant 0 : index
      %c0_21 = arith.constant 0 : index
      %48 = vector.load %arg6[%c0_20, %c0_21] : memref<1x1xf32, #tpu.memory_space<vmem>>, vector<1x1xf32>
      %49 = vector.extract %48[0, 0] : f32 from vector<1x1xf32>
      %cst_22 = arith.constant 0.000000e+00 : f32
      %50 = vector.broadcast %49 : f32 to vector<8x128xf32>
      %51 = vector.broadcast %cst_22 : f32 to vector<8x128xf32>
      %52 = arith.select %47, %50, %51 : vector<8x128xi1>, vector<8x128xf32>
      %c0_23 = arith.constant 0 : index
      %c0_24 = arith.constant 0 : index
      %53 = vector.load %arg5[%c0_23, %c0_24] : memref<8x128xf32, #tpu.memory_space<vmem>>, vector<8x128xf32>
      tpu.vector_store %arg5[%c0_23, %c0_24], %52 {strides = array<i32>} : memref<8x128xf32, #tpu.memory_space<vmem>>, vector<8x128xf32>,
    } else {
    }
    return
  }
  func.func @transform_0(%arg0: i32, %arg1: i32) -> (i32, i32) {
    %c1_i32 = arith.constant 1 : i32
    %0 = arith.muli %arg0, %c1_i32 : i32
    %1 = arith.addi %0, %arg1 : i32
    %c0_i32 = arith.constant 0 : i32
    %2 = arith.minsi %1, %c0_i32 : i32
    %c0_i32_0 = arith.constant 0 : i32
    %c0_i32_1 = arith.constant 0 : i32
    return %2, %c0_i32_0 : i32, i32
  }
  func.func @transform_1(%arg0: i32, %arg1: i32) -> (i32, i32) {
    %c1_i32 = arith.constant 1 : i32
    %0 = arith.muli %arg0, %c1_i32 : i32
    %1 = arith.addi %0, %arg1 : i32
    %c0_i32 = arith.constant 0 : i32
    %2 = arith.minsi %1, %c0_i32 : i32
    %c0_i32_0 = arith.constant 0 : i32
    %c0_i32_1 = arith.constant 0 : i32
    return %2, %c0_i32_0 : i32, i32
  }
  func.func @transform_2(%arg0: i32, %arg1: i32) -> (i32, i32) {
    %c0_i32 = arith.constant 0 : i32
    %c0_i32_0 = arith.constant 0 : i32
    %c0_i32_1 = arith.constant 0 : i32
    return %c0_i32, %c0_i32_0 : i32, i32
  }
  func.func @transform_3(%arg0: i32, %arg1: i32) -> (i32, i32) {
    %c0_i32 = arith.constant 0 : i32
    %c0_i32_0 = arith.constant 0 : i32
    return %c0_i32, %arg0 : i32, i32
  }
}

</mosaic_0001>

<llo_original>
// kernel: tpu_custom_call.1
$region0: #{tpu_custom_call.1}
  #allocation0 [shape = 'u32[]', space=smem, size = 0x4, offset = 0x4, fixed_abs, tag = 'smem constant byte address 0x4 - core index']
  #allocation1 [shape = 'u32[72,128]{1,0:T(1,128)}', space=vmem, size = 0x9000, scoped, tag = 'internal scratch']
  #allocation2 [shape = 'f32[1,1]{1,0:T(1,128)}', space=vmem, size = 0x200, scoped, tag = 'scratch operand']
  %s0 = inlined_call_operand.vmem [shape: s32[8,1], index: 0, kind: input, shape index: {}]
  %s1 = inlined_call_operand.vmem [shape: f32[8,32], index: 1, kind: input, shape index: {}]
  %s2 = inlined_call_operand.hbm [shape: f32[16,32], index: 2, kind: input, shape index: {}]
  %s3 = inlined_call_operand.hbm [shape: f32[8,128], index: 3, kind: output, shape index: {}]
  %s4 = sld [smem:[#allocation0]]
  $region34: #{tpu_custom_call.1} parent=0
    _
  %s6 = ssub.s32 1, %s4
  %s7 = scalar_select 0, %s6, %s4
  $region1: #{tpu_custom_call.1} parent=0
    #allocation3 [shape = 'u8[8192]{0}', space=vmem, size = 0x2000, scoped, tag = 'input window, operand 2, single buffered']
    #allocation4 [shape = 's32[1]{0}', space=sflag, size = 0x4, scoped, tag = 'scoped memory for tpu_custom_call.1']
    #allocation5 [shape = 's32[1]{0}', space=sflag, size = 0x4, scoped, tag = 'scoped memory for tpu_custom_call.1']
    #allocation6 [shape = 'u8[4096]{0}', space=vmem, size = 0x1000, scoped, tag = 'output window, operand 0, single buffered']
    %8 = vsyncpa [#allocation4], 0
    %9 = vsyncpa [#allocation5], 0
    // Predicated region
    $region2: #{tpu_custom_call.1} parent=1 // pred_check
      _
    $region3: #{tpu_custom_call.1} parent=1 // pred_check_branch
      %11 = sbr.rel (0) target = $region5
    $region4: #{tpu_custom_call.1} parent=1 // pred_region
      %s12 = sadd.s32 0, 0
      %p13 = scmp.lt.s32.totalorder %s12, 0
      %s14 = scalar_select %p13, %s12, 0
      %p15 = scmp.lt.s32.totalorder %s14, 0
      %s16 = scalar_select %p15, %s14, 0
      %s17 = smul.addr %s16, 8
      %s18 = scalar_lea.vmem %s0, %s17
      %s19 = sadd.s32 0, 0
      %p20 = scmp.lt.s32.totalorder %s19, 0
      %s21 = scalar_select %p20, %s19, 0
    $region5: #{tpu_custom_call.1} parent=1 // pred_fallthru
      _
    // Predicated region
    $region6: #{tpu_custom_call.1} parent=1 // pred_check
      _
    $region7: #{tpu_custom_call.1} parent=1 // pred_check_branch
      %23 = sbr.rel (0) target = $region9
    $region8: #{tpu_custom_call.1} parent=1 // pred_region
      %s24 = sadd.s32 0, 0
      %p25 = scmp.lt.s32.totalorder %s24, 0
      %s26 = scalar_select %p25, %s24, 0
      %p27 = scmp.lt.s32.totalorder %s26, 0
      %s28 = scalar_select %p27, %s26, 0
      %s29 = smul.addr %s28, 8
      %s30 = scalar_lea.vmem %s1, %s29
      %s31 = sadd.s32 0, 0
      %p32 = scmp.lt.s32.totalorder %s31, 0
      %s33 = scalar_select %p32, %s31, 0
    $region9: #{tpu_custom_call.1} parent=1 // pred_fallthru
      _
    // Predicated region
    $region10: #{tpu_custom_call.1} parent=1 // pred_check
      _
    $region11: #{tpu_custom_call.1} parent=1 // pred_check_branch
      %35 = sbr.rel (0) target = $region13
    $region12: #{tpu_custom_call.1} parent=1 // pred_region
      %37 = vsyncadd [#allocation4], 0
      %s38 = sshll.u32 %s2, 4
      %s39 = int_to_ptr.hbm [resolvable:$true] %s38
      %s40 = sshll.u32 [#allocation3], 4
      %s41 = int_to_ptr.vmem [resolvable:$true] %s40
      %46 = dma.hbm_to_vmem [thread:$0]  %s39, 256, %s41, [#allocation4], 128, 128, 8
    $region13: #{tpu_custom_call.1} parent=1 // pred_fallthru
      _
    // Predicated region
    $region14: #{tpu_custom_call.1} parent=1 // pred_check
      _
    $region15: #{tpu_custom_call.1} parent=1 // pred_check_branch
      %48 = sbr.rel (0) target = $region17
    $region16: #{tpu_custom_call.1} parent=1 // pred_region
      %50 = dma.done [#allocation4], 256
    $region17: #{tpu_custom_call.1} parent=1 // pred_fallthru
      _
    %s51 = sadd.s32 0, 0
    %p52 = scmp.lt.s32.totalorder %s51, 0
    %s53 = scalar_select %p52, %s51, 0
    %p54 = scmp.lt.s32.totalorder %s53, 0
    %s55 = scalar_select %p54, %s53, 0
    %s56 = smul.addr %s55, 8
    %s57 = scalar_lea.vmem %s0, %s56
    %s58 = sadd.s32 0, 0
    %p59 = scmp.lt.s32.totalorder %s58, 0
    %s60 = scalar_select %p59, %s58, 0
    %p61 = scmp.lt.s32.totalorder %s60, 0
    %s62 = scalar_select %p61, %s60, 0
    %s63 = smul.addr %s62, 8
    %s64 = scalar_lea.vmem %s1, %s63
    %s65 = sadd.s32 0, 0
    %p66 = scmp.lt.s32.totalorder %s65, 0
    %s67 = scalar_select %p66, %s65, 0
    %p68 = scmp.lt.s32.totalorder %s67, 0
    %s69 = scalar_select %p68, %s67, 0
    %s70 = smul.addr %s69, 8
    %s71 = scalar_lea.vmem %s0, %s70
    %s72 = sadd.s32 0, 0
    %p73 = scmp.lt.s32.totalorder %s72, 0
    %s74 = scalar_select %p73, %s72, 0
    %s75 = sadd.s32 0, 0
    %p76 = scmp.lt.s32.totalorder %s75, 0
    %s77 = scalar_select %p76, %s75, 0
    %p78 = scmp.lt.s32.totalorder %s77, 0
    %s79 = scalar_select %p78, %s77, 0
    %s80 = smul.addr %s79, 8
    %s81 = scalar_lea.vmem %s1, %s80
    %s82 = sadd.s32 0, 0
    %p83 = scmp.lt.s32.totalorder %s82, 0
    %s84 = scalar_select %p83, %s82, 0
    %p85 = scmp.eq.s32.totalorder 0, 0
    // Predicated region
    $region18: #{tpu_custom_call.1} parent=1 // pred_check
      %p86 = pneg %p85
    $region19: #{tpu_custom_call.1} parent=1 // pred_check_branch
      %88 = sbr.rel (%p86) target = $region21
    $region20: #{tpu_custom_call.1} parent=1 // pred_region
      %vm89 = vcmask 0
      %90 = vst.msk [vmem:[#allocation2] sm:$0x1] %vm89, 0.0
    $region21: #{tpu_custom_call.1} parent=1 // pred_fallthru
      _
    %v91 = vld [vmem:[%s81] sm:$0xff]
    %v92 = vld [vmem:[%s71] sm:$0xff]
    %v93 = vlaneseq
    %v94 = vand.u32 %v93, 127
    %95 = vset.pattern.permute.xlu0 0
    %96 = vperm.xlu0 %95, %v92
    %v97 = vpop.permute.xlu0 %96
    %vm98 = vcmp.eq.s32.totalorder %v97, %v94
    %v99 = vsel %vm98, 1, 0
    %v100 = vcvt.s32.f32 %v99
    %v101 = vld [vmem:[#allocation3] sm:$0xff]
    %v102 = vld [vmem:[#allocation3 + $0x8] sm:$0xff]
    %vm103 = vcmask 130048
    %v105 = vsel %vm103, %v100, 0
    %107 = vmatpush.msra.mxu0 0.0
    %108 = vmatpush.msra.mxu0 0.0
    %109 = vmatpush.msra.mxu0 0.0
    %110 = vmatpush.msra.mxu0 0.0
    %111 = vmatpush.msra.mxu0 0.0
    %112 = vmatpush.msra.mxu0 0.0
    %113 = vmatpush.msra.mxu0 0.0
    %114 = vmatpush.msra.mxu0 0.0
    %115 = vmatpush.msra.mxu0 0.0
    %116 = vmatpush.msra.mxu0 0.0
    %117 = vmatpush.msra.mxu0 0.0
    %118 = vmatpush.msra.mxu0 0.0
    %119 = vmatpush.msra.mxu0 0.0
    %120 = vmatpush.msra.mxu0 0.0
    %121 = vmatpush.msra.mxu0 %v102
    %122 = vmatpush.msra.mxu0 %v101
    %123 = vmatmul.f32.gmra.mxu0 %v105
    %v124 = vpop.f32.mrf.mxu0
    %v125 = vadd.f32 0.0, %v124
    %126 = vdwg.mxu0
    %v127 = vsub.f32 %v91, %v125
    %v128 = vmul.f32 %v127, %v127
    %vm129 = vcmask 261120
    %v130 = vsel %vm129, %v128, 0.0
    %131 = vadd.xlane.f32.xlu0 %v130
    %v132 = vpop.xlane.xlu0 %131
    %v133 = vmax.f32 %v132, 1e-12
    %v134 = vmin.f32 %v133, 1e+12
    %s135 = sadd.s32 0, 0
    %s136 = smul.u32 %s135, 8
    %v137 = vlaneseq
    %v138 = vshrl.u32 %v137, 7
    %v139 = vstv %s136
    %v140 = vadd.s32 %v139, %v138
    %vm141 = vcmp.lt.s32.totalorder %v140, 8
    %v142 = vsel %vm141, %v134, 0.0
    %v143 = vld [vmem:[#allocation2] sm:$0x1]
    %vm144 = vcmask 7168
    %v145 = vsel %vm144, %v142, 0.0
    %146 = vadd.xlane.f32.xlu0 %v145
    %v147 = vpop.xlane.xlu0 %146
    %v148 = vrot.slane %v147, 4
    %v149 = vadd.f32 %v147, %v148
    %v150 = vrot.slane %v149, 2
    %v151 = vadd.f32 %v149, %v150
    %v152 = vrot.slane %v151, 1
    %v153 = vadd.f32 %v151, %v152
    %s154 = vtos %v153
    %v155 = vstv %s154
    %v156 = vadd.f32 %v143, %v155
    %vm157 = vcmask 0
    %158 = vst.msk [vmem:[#allocation2] sm:$0x1] %vm157, %v156
    // Predicated region
    $region22: #{tpu_custom_call.1} parent=1 // pred_check
      %p159 = pneg %p85
    $region23: #{tpu_custom_call.1} parent=1 // pred_check_branch
      %161 = sbr.rel (%p159) target = $region25
    $region24: #{tpu_custom_call.1} parent=1 // pred_region
      %vm162 = vcmp.eq.s32.totalorder %v138, 0
      %vm163 = vcmp.eq.s32.totalorder %v94, 0
      %vm164 = vmand %vm162, %vm163
      %v165 = vld [vmem:[#allocation2] sm:$0x1]
      %s166 = vtos %v165
      %v167 = vstv %s166
      %v168 = vsel %vm164, %v167, 0.0
      %169 = vst [vmem:[#allocation6] sm:$0xff] %v168
    $region25: #{tpu_custom_call.1} parent=1 // pred_fallthru
      _
    // Predicated region
    $region26: #{tpu_custom_call.1} parent=1 // pred_check
      _
    $region27: #{tpu_custom_call.1} parent=1 // pred_check_branch
      %171 = sbr.rel (0) target = $region29
    $region28: #{tpu_custom_call.1} parent=1 // pred_region
      %173 = vsyncadd [#allocation5], 0
      %s175 = sshll.u32 [#allocation6], 4
      %s176 = int_to_ptr.vmem [resolvable:$true] %s175
      %s177 = sshll.u32 %s3, 4
      %s178 = int_to_ptr.hbm [resolvable:$true] %s177
      %180 = dma.vmem_to_hbm [thread:$0]  %s176, 128, %s178, [#allocation5]
    $region29: #{tpu_custom_call.1} parent=1 // pred_fallthru
      _
    // Predicated region
    $region30: #{tpu_custom_call.1} parent=1 // pred_check
      _
    $region31: #{tpu_custom_call.1} parent=1 // pred_check_branch
      %182 = sbr.rel (0) target = $region33
    $region32: #{tpu_custom_call.1} parent=1 // pred_region
      %184 = dma.done [#allocation5], 128
    $region33: #{tpu_custom_call.1} parent=1 // pred_fallthru
      _
    %185 = vsyncpa [#allocation4], 1
    %186 = vsyncpa [#allocation5], 1

</llo_original>
